<compile_context>
chip_gen: v6e
topology: v6e:2x2x1
jax: 0.10.0
libtpu: 0.0.40
codegen_flags: <defaults>
</compile_context>

<pallas_src>
import functools

import jax
import jax.numpy as jnp
from jax import lax
from jax.experimental import pallas as pl
from jax.experimental.pallas import tpu as pltpu


def _label_smoothing_kernel(pred_ref, tgt_ref, out_ref, acc_ref, *,
                            classes, smoothing, n_total, tile_n):
    i = pl.program_id(0)
    confidence = 1.0 - smoothing
    smooth_val = smoothing / (classes - 1)

    @pl.when(i == 0)
    def _():
        acc_ref[...] = jnp.zeros_like(acc_ref)

    pred = pred_ref[...].astype(jnp.float32)            # (tile_n, C), f32 accum
    tgt = tgt_ref[...]                                   # (tile_n, 1) int32

    # Stable log-sum-exp along the class (lane) axis.
    m = jnp.max(pred, axis=-1, keepdims=True)
    shifted = pred - m                                   # (tile_n, C)
    lse = jnp.log(jnp.sum(jnp.exp(shifted), axis=-1, keepdims=True))

    # Pieces needed for the closed-form per-row loss (no logp / true_dist
    # materialization).  Using sum_c(true_dist) == 1:
    #   loss_row = lse - conf*shifted[tgt] - smooth*(sum_c(shifted) - shifted[tgt])
    class_ids = lax.broadcasted_iota(jnp.int32, shifted.shape, 1)
    onehot = class_ids == tgt                            # (tile_n, C) bool
    row_sum = jnp.sum(shifted, axis=-1, keepdims=True)   # (tile_n, 1)
    shifted_tgt = jnp.sum(jnp.where(onehot, shifted, 0.0),
                          axis=-1, keepdims=True)        # (tile_n, 1)

    per_row = (lse
               - confidence * shifted_tgt
               - smooth_val * (row_sum - shifted_tgt))   # (tile_n, 1)

    # Mask padded rows of the final (partial) tile so garbage rows never
    # pollute the accumulated sum.
    row_ids = lax.broadcasted_iota(jnp.int32, per_row.shape, 0)
    valid = (i * tile_n + row_ids) < n_total
    per_row = jnp.where(valid, per_row, 0.0)

    acc_ref[...] += jnp.sum(per_row, axis=0, keepdims=True)   # (1, 1) partial sum

    @pl.when(i == pl.num_programs(0) - 1)
    def _():
        out_ref[...] = acc_ref[...] * (1.0 / n_total)    # divide by true N once


def _pick_tile_n(n, c, itemsize):
    # Keep each pred buffer around <=4 MiB so 2x buffering fits v5e's 16 MiB
    # scoped-VMEM default and leaves plenty of headroom on v6e/v7x.
    budget_rows = max(8, (4 * 1024 * 1024) // max(1, c * itemsize))
    tile_n = min(512, budget_rows)
    tile_n = max(8, (tile_n // 8) * 8)                   # sublane-aligned
    if n <= tile_n:
        tile_n = n                                       # full-dim block (legal)
    return tile_n


def label_smoothing_loss(pred, target, *, classes, smoothing=0.0, tile_n=None):
    """pred: (N, C) float (f32 or bf16); target: (N,) int. Returns f32 scalar."""
    n, c = pred.shape
    assert c == classes
    tgt2d = target.astype(jnp.int32).reshape(n, 1)

    if tile_n is None:
        tile_n = _pick_tile_n(n, c, jnp.dtype(pred.dtype).itemsize)
    grid = (pl.cdiv(n, tile_n),)

    kernel = functools.partial(
        _label_smoothing_kernel,
        classes=classes,
        smoothing=float(smoothing),
        n_total=n,
        tile_n=tile_n,
    )

    out = pl.pallas_call(
        kernel,
        out_shape=jax.ShapeDtypeStruct((1, 1), jnp.float32),
        grid_spec=pltpu.PrefetchScalarGridSpec(
            num_scalar_prefetch=0,
            grid=grid,
            in_specs=[
                pl.BlockSpec((tile_n, c), lambda i: (i, 0)),
                pl.BlockSpec((tile_n, 1), lambda i: (i, 0)),
            ],
            out_specs=pl.BlockSpec((1, 1), lambda i: (0, 0)),
            scratch_shapes=[pltpu.VMEM((1, 1), jnp.float32)],
        ),
        compiler_params=pltpu.CompilerParams(
            dimension_semantics=("arbitrary",),       # N axis is a reduction
            vmem_limit_bytes=32 * 1024 * 1024,
        ),
    )(pred, tgt2d)
    return out[0, 0]


def _reference(pred, target, *, classes, smoothing):
    confidence = 1.0 - smoothing
    logp = jax.nn.log_softmax(pred.astype(jnp.float32), axis=-1)
    true_dist = jnp.full_like(logp, smoothing / (classes - 1))
    onehot = jax.nn.one_hot(target, classes, dtype=jnp.float32)
    true_dist = true_dist * (1.0 - onehot) + onehot * confidence
    return jnp.mean(jnp.sum(-true_dist * logp, axis=-1))


if __name__ == "__main__":
    key = jax.random.PRNGKey(0)
    smoothing = 0.1

    # Case 1: small single-tile problem.
    k1, k2, k3, k4 = jax.random.split(key, 4)
    N1, C1 = 8, 32
    pred1 = jax.random.normal(k1, (N1, C1), dtype=jnp.float32)
    tgt1 = jax.random.randint(k2, (N1,), 0, C1, dtype=jnp.int32)
    loss1 = jax.block_until_ready(
        label_smoothing_loss(pred1, tgt1, classes=C1, smoothing=smoothing))
    ref1 = _reference(pred1, tgt1, classes=C1, smoothing=smoothing)
    assert jnp.allclose(loss1, ref1, atol=1e-5, rtol=1e-5), (loss1, ref1)

    # Case 2: forces multi-tile grid + ragged last tile (N=20, tile_n=8),
    # exercising the accumulator init/finalize and row masking paths.
    N2, C2 = 20, 32
    pred2 = jax.random.normal(k3, (N2, C2), dtype=jnp.float32)
    tgt2 = jax.random.randint(k4, (N2,), 0, C2, dtype=jnp.int32)
    loss2 = jax.block_until_ready(
        label_smoothing_loss(pred2, tgt2, classes=C2, smoothing=smoothing,
                             tile_n=8))
    ref2 = _reference(pred2, tgt2, classes=C2, smoothing=smoothing)
    assert jnp.allclose(loss2, ref2, atol=1e-5, rtol=1e-5), (loss2, ref2)

    print("KERNEL_OK")
</pallas_src>

<mosaic_0001>
module attributes {stable_mosaic.version = 11 : i64} {
  func.func @_label_smoothing_kernel(%arg0: i32, %arg1: memref<8x32xf32, #tpu.memory_space<vmem>>, %arg2: memref<8x1xi32, #tpu.memory_space<vmem>>, %arg3: memref<1x1xf32, #tpu.memory_space<vmem>>, %arg4: memref<1x1xf32, #tpu.memory_space<vmem>>) attributes {dimension_semantics = [#tpu.dimension_semantics<arbitrary>], iteration_bounds = array<i64: 1>, scalar_prefetch = 0 : i64, scratch_operands = 1 : i64, tpu.core_type = #tpu.core_type<tc>, window_params = [{transform_indices = @transform_0, window_bounds = array<i64: 8, 32>}, {transform_indices = @transform_1, window_bounds = array<i64: 8, 1>}, {pipeline_mode = #tpu.pipeline_mode<synchronous>, transform_indices = @transform_2, window_bounds = array<i64: 1, 1>}]} {
    %c0_i32 = arith.constant 0 : i32
    %0 = arith.cmpi eq, %arg0, %c0_i32 : i32
    %1 = arith.extui %0 : i1 to i32
    %c0_i32_0 = arith.constant 0 : i32
    %2 = arith.cmpi ne, %1, %c0_i32_0 : i32
    scf.if %2 {
      %cst_19 = arith.constant 0.000000e+00 : f32
      %45 = vector.broadcast %cst_19 : f32 to vector<1x1xf32>
      %c0_20 = arith.constant 0 : index
      %c0_21 = arith.constant 0 : index
      %46 = vector.load %arg4[%c0_20, %c0_21] : memref<1x1xf32, #tpu.memory_space<vmem>>, vector<1x1xf32>
      tpu.vector_store %arg4[%c0_20, %c0_21], %45 {strides = array<i32>} : memref<1x1xf32, #tpu.memory_space<vmem>>, vector<1x1xf32>,
    } else {
    }
    %c0 = arith.constant 0 : index
    %c0_1 = arith.constant 0 : index
    %3 = vector.load %arg1[%c0, %c0_1] : memref<8x32xf32, #tpu.memory_space<vmem>>, vector<8x32xf32>
    %c0_2 = arith.constant 0 : index
    %c0_3 = arith.constant 0 : index
    %4 = vector.load %arg2[%c0_2, %c0_3] : memref<8x1xi32, #tpu.memory_space<vmem>>, vector<8x1xi32>
    %cst = arith.constant dense<0xFF800000> : vector<8xf32>
    %5 = vector.multi_reduction <maximumf>, %3, %cst [1] : vector<8x32xf32> to vector<8xf32>
    %6 = vector.shape_cast %5 : vector<8xf32> to vector<8x1xf32>
    %7 = vector.broadcast %6 : vector<8x1xf32> to vector<8x32xf32>
    %8 = arith.subf %3, %7 : vector<8x32xf32>
    %9 = math.exp %8 : vector<8x32xf32>
    %cst_4 = arith.constant dense<0.000000e+00> : vector<8xf32>
    %10 = vector.multi_reduction <add>, %9, %cst_4 [1] : vector<8x32xf32> to vector<8xf32>
    %11 = vector.shape_cast %10 : vector<8xf32> to vector<8x1xf32>
    %12 = math.log %11 : vector<8x1xf32>
    %13 = tpu.iota {dimensions = array<i32: 1>} : vector<8x32xi32>
    %14 = vector.broadcast %4 : vector<8x1xi32> to vector<8x32xi32>
    %15 = arith.cmpi eq, %13, %14 : vector<8x32xi32>
    %cst_5 = arith.constant dense<0.000000e+00> : vector<8xf32>
    %16 = vector.multi_reduction <add>, %8, %cst_5 [1] : vector<8x32xf32> to vector<8xf32>
    %17 = vector.shape_cast %16 : vector<8xf32> to vector<8x1xf32>
    %cst_6 = arith.constant 0.000000e+00 : f32
    %18 = vector.broadcast %cst_6 : f32 to vector<8x32xf32>
    %19 = arith.select %15, %8, %18 : vector<8x32xi1>, vector<8x32xf32>
    %cst_7 = arith.constant dense<0.000000e+00> : vector<8xf32>
    %20 = vector.multi_reduction <add>, %19, %cst_7 [1] : vector<8x32xf32> to vector<8xf32>
    %21 = vector.shape_cast %20 : vector<8xf32> to vector<8x1xf32>
    %cst_8 = arith.constant 0.899999976 : f32
    %22 = vector.broadcast %cst_8 : f32 to vector<8x1xf32>
    %23 = arith.mulf %22, %21 : vector<8x1xf32>
    %24 = arith.subf %12, %23 : vector<8x1xf32>
    %25 = arith.subf %17, %21 : vector<8x1xf32>
    %cst_9 = arith.constant 0.0032258064 : f32
    %26 = vector.broadcast %cst_9 : f32 to vector<8x1xf32>
    %27 = arith.mulf %26, %25 : vector<8x1xf32>
    %28 = arith.subf %24, %27 : vector<8x1xf32>
    %29 = tpu.iota {dimensions = array<i32: 0>} : vector<8x1xi32>
    %c8_i32 = arith.constant 8 : i32
    %30 = arith.muli %arg0, %c8_i32 : i32
    %31 = vector.broadcast %30 : i32 to vector<8x1xi32>
    %32 = arith.addi %31, %29 : vector<8x1xi32>
    %c8_i32_10 = arith.constant 8 : i32
    %33 = vector.broadcast %c8_i32_10 : i32 to vector<8x1xi32>
    %34 = arith.cmpi slt, %32, %33 : vector<8x1xi32>
    %cst_11 = arith.constant 0.000000e+00 : f32
    %35 = vector.broadcast %cst_11 : f32 to vector<8x1xf32>
    %36 = arith.select %34, %28, %35 : vector<8x1xi1>, vector<8x1xf32>
    %c0_12 = arith.constant 0 : index
    %c0_13 = arith.constant 0 : index
    %37 = vector.load %arg4[%c0_12, %c0_13] : memref<1x1xf32, #tpu.memory_space<vmem>>, vector<1x1xf32>
    %cst_14 = arith.constant dense<0.000000e+00> : vector<1xf32>
    %38 = vector.multi_reduction <add>, %36, %cst_14 [0] : vector<8x1xf32> to vector<1xf32>
    %39 = vector.shape_cast %38 : vector<1xf32> to vector<1x1xf32>
    %40 = arith.addf %37, %39 : vector<1x1xf32>
    %c0_15 = arith.constant 0 : index
    %c0_16 = arith.constant 0 : index
    %41 = vector.load %arg4[%c0_15, %c0_16] : memref<1x1xf32, #tpu.memory_space<vmem>>, vector<1x1xf32>
    tpu.vector_store %arg4[%c0_15, %c0_16], %40 {strides = array<i32>} : memref<1x1xf32, #tpu.memory_space<vmem>>, vector<1x1xf32>,
    %c0_i32_17 = arith.constant 0 : i32
    %42 = arith.cmpi eq, %arg0, %c0_i32_17 : i32
    %43 = arith.extui %42 : i1 to i32
    %c0_i32_18 = arith.constant 0 : i32
    %44 = arith.cmpi ne, %43, %c0_i32_18 : i32
    scf.if %44 {
      %c0_19 = arith.constant 0 : index
      %c0_20 = arith.constant 0 : index
      %45 = vector.load %arg4[%c0_19, %c0_20] : memref<1x1xf32, #tpu.memory_space<vmem>>, vector<1x1xf32>
      %cst_21 = arith.constant 1.250000e-01 : f32
      %46 = vector.broadcast %cst_21 : f32 to vector<1x1xf32>
      %47 = arith.mulf %45, %46 : vector<1x1xf32>
      %c0_22 = arith.constant 0 : index
      %c0_23 = arith.constant 0 : index
      %48 = vector.load %arg3[%c0_22, %c0_23] : memref<1x1xf32, #tpu.memory_space<vmem>>, vector<1x1xf32>
      tpu.vector_store %arg3[%c0_22, %c0_23], %47 {strides = array<i32>} : memref<1x1xf32, #tpu.memory_space<vmem>>, vector<1x1xf32>,
    } else {
    }
    return
  }
  func.func @transform_0(%arg0: i32) -> (i32, i32) {
    %c0_i32 = arith.constant 0 : i32
    %c0_i32_0 = arith.constant 0 : i32
    return %arg0, %c0_i32 : i32, i32
  }
  func.func @transform_1(%arg0: i32) -> (i32, i32) {
    %c0_i32 = arith.constant 0 : i32
    %c0_i32_0 = arith.constant 0 : i32
    return %arg0, %c0_i32 : i32, i32
  }
  func.func @transform_2(%arg0: i32) -> (i32, i32) {
    %c0_i32 = arith.constant 0 : i32
    %c0_i32_0 = arith.constant 0 : i32
    %c0_i32_1 = arith.constant 0 : i32
    return %c0_i32, %c0_i32_0 : i32, i32
  }
}

</mosaic_0001>

<llo_original>
// kernel: tpu_custom_call.1
$region0: #{tpu_custom_call.1}
  #allocation0 [shape = 'u32[]', space=smem, size = 0x4, offset = 0x4, fixed_abs, tag = 'smem constant byte address 0x4 - core index']
  #allocation1 [shape = 'u32[144,128]{1,0:T(1,128)}', space=vmem, size = 0x12000, scoped, tag = 'internal scratch']
  #allocation2 [shape = 'f32[1,1]{1,0:T(1,128)}', space=vmem, size = 0x200, scoped, tag = 'scratch operand']
  %s0 = inlined_call_operand.vmem [shape: f32[8,32], index: 0, kind: input, shape index: {}]
  %s1 = inlined_call_operand.vmem [shape: s32[8,1], index: 1, kind: input, shape index: {}]
  %s2 = inlined_call_operand.hbm [shape: f32[1,1], index: 2, kind: output, shape index: {}]
  %s3 = sld [smem:[#allocation0]]
  $region26: #{tpu_custom_call.1} parent=0
    _
  %s5 = ssub.s32 1, %s3
  %s6 = scalar_select 0, %s5, %s3
  $region1: #{tpu_custom_call.1} parent=0
    #allocation3 [shape = 'u8[512]{0}', space=vmem, size = 0x400, scoped, tag = 'output window, operand 0, single buffered']
    #allocation4 [shape = 's32[1]{0}', space=sflag, size = 0x4, scoped, tag = 'scoped memory for tpu_custom_call.1']
    %7 = vsyncpa [#allocation4], 0
    // Predicated region
    $region2: #{tpu_custom_call.1} parent=1 // pred_check
      _
    $region3: #{tpu_custom_call.1} parent=1 // pred_check_branch
      %9 = sbr.rel (0) target = $region5
    $region4: #{tpu_custom_call.1} parent=1 // pred_region
      _
    $region5: #{tpu_custom_call.1} parent=1 // pred_fallthru
      _
    // Predicated region
    $region6: #{tpu_custom_call.1} parent=1 // pred_check
      _
    $region7: #{tpu_custom_call.1} parent=1 // pred_check_branch
      %11 = sbr.rel (0) target = $region9
    $region8: #{tpu_custom_call.1} parent=1 // pred_region
      _
    $region9: #{tpu_custom_call.1} parent=1 // pred_fallthru
      _
    %p12 = scmp.eq.s32.totalorder 0, 0
    // Predicated region
    $region10: #{tpu_custom_call.1} parent=1 // pred_check
      %p13 = pneg %p12
    $region11: #{tpu_custom_call.1} parent=1 // pred_check_branch
      %15 = sbr.rel (%p13) target = $region13
    $region12: #{tpu_custom_call.1} parent=1 // pred_region
      %vm16 = vcmask 0
      %17 = vst.msk [vmem:[#allocation2] sm:$0x1] %vm16, 0.0
    $region13: #{tpu_custom_call.1} parent=1 // pred_fallthru
      _
    %v18 = vld [vmem:[%s0] sm:$0xff]
    %v19 = vld [vmem:[%s1] sm:$0xff]
    %vm20 = vcmask 261120
    %v21 = vsel %vm20, %v18, -inf
    %22 = vmax.xlane.f32.xlu0 %v21
    %v23 = vpop.xlane.xlu0 %22
    %v24 = vsub.f32 %v18, %v23
    %v25 = vmul.f32 %v24, 1.442695
    %v26 = vpow.pop %v25
    %v27 = vsel %vm20, %v26, 0.0
    %28 = vadd.xlane.f32.xlu0 %v27
    %v29 = vpop.xlane.xlu0 %28
    %v30 = vlog2.pop %v29
    %v31 = vmul.f32 %v30, 0.6931472
    %v32 = vlaneseq
    %v33 = vand.u32 %v32, 127
    %34 = vset.pattern.permute.xlu0 0
    %35 = vperm.xlu0 %34, %v19
    %v36 = vpop.permute.xlu0 %35
    %vm37 = vcmp.eq.s32.totalorder %v33, %v36
    %v38 = vsel %vm20, %v24, 0.0
    %39 = vadd.xlane.f32.xlu0 %v38
    %v40 = vpop.xlane.xlu0 %39
    %v41 = vsel %vm37, %v24, 0.0
    %v42 = vsel %vm20, %v41, 0.0
    %43 = vadd.xlane.f32.xlu0 %v42
    %v44 = vpop.xlane.xlu0 %43
    %v45 = vmul.f32 %v44, 0.9
    %v46 = vsub.f32 %v31, %v45
    %v47 = vsub.f32 %v40, %v44
    %v48 = vmul.f32 %v47, 0.0032258064
    %v49 = vsub.f32 %v46, %v48
    %v50 = vlaneseq
    %v51 = vshrl.u32 %v50, 7
    %s52 = smul.u32 0, 8
    %v53 = vstv %s52
    %v54 = vadd.s32 %v53, %v51
    %vm55 = vcmp.lt.s32.totalorder %v54, 8
    %v56 = vsel %vm55, %v49, 0.0
    %v57 = vld [vmem:[#allocation2] sm:$0x1]
    %v58 = vrot.slane %v56, 4
    %v59 = vadd.f32 %v56, %v58
    %v60 = vrot.slane %v59, 2
    %v61 = vadd.f32 %v59, %v60
    %v62 = vrot.slane %v61, 1
    %v63 = vadd.f32 %v61, %v62
    %v64 = vadd.f32 %v57, %v63
    %vm65 = vcmask 0
    %66 = vst.msk [vmem:[#allocation2] sm:$0x1] %vm65, %v64
    // Predicated region
    $region14: #{tpu_custom_call.1} parent=1 // pred_check
      %p67 = pneg %p12
    $region15: #{tpu_custom_call.1} parent=1 // pred_check_branch
      %69 = sbr.rel (%p67) target = $region17
    $region16: #{tpu_custom_call.1} parent=1 // pred_region
      %v70 = vld [vmem:[#allocation2] sm:$0x1]
      %v71 = vmul.f32 %v70, 0.125
      %72 = vst.msk [vmem:[#allocation3] sm:$0x1] %vm65, %v71
    $region17: #{tpu_custom_call.1} parent=1 // pred_fallthru
      _
    // Predicated region
    $region18: #{tpu_custom_call.1} parent=1 // pred_check
      _
    $region19: #{tpu_custom_call.1} parent=1 // pred_check_branch
      %74 = sbr.rel (0) target = $region21
    $region20: #{tpu_custom_call.1} parent=1 // pred_region
      %s76 = ssub.s32 16, 16
      %77 = vsyncadd [#allocation4], %s76
      %s79 = sshll.u32 [#allocation3], 4
      %s80 = int_to_ptr.vmem [resolvable:$true] %s79
      %82 = dma.vmem_to_hbm [thread:$0]  %s80, 16, %s2, [#allocation4]
    $region21: #{tpu_custom_call.1} parent=1 // pred_fallthru
      _
    // Predicated region
    $region22: #{tpu_custom_call.1} parent=1 // pred_check
      _
    $region23: #{tpu_custom_call.1} parent=1 // pred_check_branch
      %84 = sbr.rel (0) target = $region25
    $region24: #{tpu_custom_call.1} parent=1 // pred_region
      %85 = dma.done [#allocation4], 16
    $region25: #{tpu_custom_call.1} parent=1 // pred_fallthru
      _
    %86 = vsyncpa [#allocation4], 1

</llo_original>
